<compile_context>
chip_gen: v7x
topology: tpu7x:2x2x1
jax: 0.10.0
libtpu: 0.0.40
codegen_flags: <defaults>
</compile_context>

<pallas_src>
import functools
import itertools
import math

import jax
import jax.numpy as jnp
from jax.experimental import pallas as pl
from jax.experimental.pallas import tpu as pltpu

_TEN_OVER_LN10 = 10.0 / math.log(10.0)


def _pairwise_sisnr_kernel(pr_ref, t_ref, out_ref, *, eps, zero_mean, trim):
    """out[b, j, i] = SI-SNR(estimate pr[b, i], target t[b, j]) for a batch block.

    pr_ref : (Bb, S, T_pr) VMEM tile of estimates
    t_ref  : (Bb, S, T_t)  VMEM tile of targets
    out_ref: (Bb, S, S)    VMEM tile of pairwise SI-SNR values
    """
    if trim is None:
        pr = pr_ref[...]
        t = t_ref[...]
    else:
        # Restrict to the common length inside the kernel (no wrapper HBM copy).
        pr = pr_ref[:, :, :trim]
        t = t_ref[:, :, :trim]

    pr = pr.astype(jnp.float32)
    t = t.astype(jnp.float32)
    if zero_mean:
        pr = pr - jnp.mean(pr, axis=-1, keepdims=True)
        t = t - jnp.mean(t, axis=-1, keepdims=True)

    # Pairwise cross-correlations on the MXU: cross[b, j, i] = <t_j, pr_i>.
    cross = jnp.einsum('bjt,bit->bji', t, pr,
                       preferred_element_type=jnp.float32)          # (Bb, S, S)
    t_energy = jnp.sum(t * t, axis=-1, keepdims=True)               # (Bb, S, 1)
    pr_energy = jnp.sum(pr * pr, axis=-1)[:, None, :]               # (Bb, 1, S)

    # Algebraic expansion of the reference computation:
    #   alpha = <pr_i, t_j> / (||t_j||^2 + eps)
    #   ||s_t||^2 = alpha^2 * ||t_j||^2
    #   ||e_t||^2 = ||pr_i||^2 - 2*alpha*<pr_i,t_j> + ||s_t||^2
    alpha = cross / (t_energy + eps)
    num = alpha * alpha * t_energy
    den = pr_energy - (2.0 * alpha) * cross + num + eps

    # Single full-block store; log10 via natural log on the EUP.
    out_ref[...] = _TEN_OVER_LN10 * (jnp.log(num) - jnp.log(den))


def perm_invariant_sisdr(pr_batch, t_batch, *, eps=1e-9, zero_mean=False,
                         backward_loss=True, return_individual_results=False,
                         target_block_bytes=1 << 20):
    """JAX/Pallas equivalent of PermInvariantSISDR.forward (improvement=False)."""
    B, S, T_pr = pr_batch.shape
    B_t, S_t, T_t = t_batch.shape
    assert B == B_t and S == S_t, "pr_batch / t_batch must agree in (batch, sources)"

    min_len = min(T_pr, T_t)
    trim = None if T_pr == T_t else min_len   # trim inside the kernel only if needed

    # Batch-block size: ~target_block_bytes per input block per grid step,
    # sized well under the v7x 32 MiB default scoped VMEM limit.
    itemsize = max(jnp.dtype(pr_batch.dtype).itemsize,
                   jnp.dtype(t_batch.dtype).itemsize)
    per_batch_bytes = S * max(T_pr, T_t) * itemsize
    bb = int(min(B, max(1, target_block_bytes // per_batch_bytes)))
    grid_b = pl.cdiv(B, bb)

    kernel = functools.partial(_pairwise_sisnr_kernel, eps=eps,
                               zero_mean=zero_mean, trim=trim)

    pair_sisnr = pl.pallas_call(
        kernel,
        out_shape=jax.ShapeDtypeStruct((B, S, S), jnp.float32),
        grid_spec=pltpu.PrefetchScalarGridSpec(
            num_scalar_prefetch=0,
            grid=(grid_b,),
            in_specs=[
                pl.BlockSpec((bb, S, T_pr), lambda b: (b, 0, 0)),
                pl.BlockSpec((bb, S, T_t), lambda b: (b, 0, 0)),
            ],
            out_specs=pl.BlockSpec((bb, S, S), lambda b: (b, 0, 0)),
        ),
        compiler_params=pltpu.CompilerParams(
            dimension_semantics=("parallel",),     # batch axis shards across TCs (v7x)
            vmem_limit_bytes=48 << 20,             # headroom, still < v7x 64 MiB VMEM
        ),
    )(pr_batch, t_batch)

    # pair_sisnr[b, j, i] = SI-SNR(pr[b, i], t[b, j]).
    # Reference: all_sisnrs[b, s, p] = SI-SNR(pr[b, perm_p[s]], t[b, s]).
    perms = list(itertools.permutations(range(S)))
    perm_idx = jnp.asarray(perms, dtype=jnp.int32)                  # (P, S)
    src_idx = jnp.arange(S, dtype=jnp.int32)[None, :]               # (1, S)
    all_sisnrs = pair_sisnr[:, src_idx, perm_idx]                   # (B, P, S)

    best_sisdr = jnp.max(jnp.mean(all_sisnrs, axis=-1), axis=-1)    # (B,)
    # TODO(synk): improvement=True path (SISDRi with initial_mixtures) not implemented.
    if not return_individual_results:
        best_sisdr = jnp.mean(best_sisdr)
    if backward_loss:
        return -best_sisdr
    return best_sisdr


def _reference_perm_invariant_sisdr(pr_batch, t_batch, eps=1e-9):
    """Pure-JAX transcription of the PyTorch forward (default flags) for checking."""
    pr = pr_batch.astype(jnp.float32)
    t = t_batch.astype(jnp.float32)
    S = pr.shape[1]
    t_t_diag = jnp.sum(t * t, axis=-1, keepdims=True)
    sisnr_l = []
    for perm in itertools.permutations(range(S)):
        p = pr[:, list(perm), :]
        s_t = jnp.sum(p * t, axis=-1, keepdims=True) / (t_t_diag + eps) * t
        e_t = p - s_t
        sisnr = 10.0 * jnp.log10(
            jnp.sum(s_t * s_t, axis=-1, keepdims=True)
            / (jnp.sum(e_t * e_t, axis=-1, keepdims=True) + eps))
        sisnr_l.append(sisnr)
    all_sisnrs = jnp.concatenate(sisnr_l, axis=-1)       # (B, S, P)
    best = jnp.max(jnp.mean(all_sisnrs, axis=-2), axis=-1)
    return -jnp.mean(best)


if __name__ == "__main__":
    B, S, T = 2, 3, 256
    key = jax.random.PRNGKey(0)
    k1, k2, _ = jax.random.split(key, 3)
    t_batch = jax.random.normal(k1, (B, S, T), dtype=jnp.float32)
    # estimates = noisy, shuffled targets so the permutation search matters
    noise = 0.3 * jax.random.normal(k2, (B, S, T), dtype=jnp.float32)
    shuffle = jnp.asarray([2, 0, 1], dtype=jnp.int32)
    pr_batch = t_batch[:, shuffle, :] + noise

    loss = perm_invariant_sisdr(pr_batch, t_batch, eps=1e-9)
    loss = jax.block_until_ready(loss)

    ref = _reference_perm_invariant_sisdr(pr_batch, t_batch, eps=1e-9)
    assert jnp.allclose(loss, ref, rtol=1e-4, atol=1e-4), (loss, ref)

    print("KERNEL_OK")
</pallas_src>

<mosaic_0001>
module attributes {stable_mosaic.version = 11 : i64} {
  func.func @_pairwise_sisnr_kernel(%arg0: i32, %arg1: memref<2x3x256xf32, #tpu.memory_space<vmem>>, %arg2: memref<2x3x256xf32, #tpu.memory_space<vmem>>, %arg3: memref<2x3x3xf32, #tpu.memory_space<vmem>>) attributes {dimension_semantics = [#tpu.dimension_semantics<parallel>], iteration_bounds = array<i64: 1>, scalar_prefetch = 0 : i64, scratch_operands = 0 : i64, tpu.core_type = #tpu.core_type<tc>, window_params = [{transform_indices = @transform_0, window_bounds = array<i64: 2, 3, 256>}, {transform_indices = @transform_1, window_bounds = array<i64: 2, 3, 256>}, {transform_indices = @transform_2, window_bounds = array<i64: 2, 3, 3>}]} {
    %c0 = arith.constant 0 : index
    %c0_0 = arith.constant 0 : index
    %c0_1 = arith.constant 0 : index
    %0 = vector.load %arg1[%c0, %c0_0, %c0_1] : memref<2x3x256xf32, #tpu.memory_space<vmem>>, vector<2x3x256xf32>
    %c0_2 = arith.constant 0 : index
    %c0_3 = arith.constant 0 : index
    %c0_4 = arith.constant 0 : index
    %1 = vector.load %arg2[%c0_2, %c0_3, %c0_4] : memref<2x3x256xf32, #tpu.memory_space<vmem>>, vector<2x3x256xf32>
    "tpu.trace_start"() <{level = 10 : i32, message = "bjt,bit->bji"}> : () -> ()
    %cst = arith.constant dense<0.000000e+00> : vector<2x3x3xf32>
    %2 = tpu.matmul %1, %0, %cst {dimension_numbers = #tpu.dot_dimension_numbers<[2], [2], [1], [1], [0, 0, 0, 1, 1, 1], [0], [0]>} : vector<2x3x256xf32>, vector<2x3x256xf32>, vector<2x3x3xf32> -> vector<2x3x3xf32>
    "tpu.trace_stop"() : () -> ()
    %3 = arith.mulf %1, %1 : vector<2x3x256xf32>
    %cst_5 = arith.constant dense<0.000000e+00> : vector<2x3xf32>
    %4 = vector.multi_reduction <add>, %3, %cst_5 [2] : vector<2x3x256xf32> to vector<2x3xf32>
    %5 = vector.shape_cast %4 : vector<2x3xf32> to vector<2x3x1xf32>
    %6 = arith.mulf %0, %0 : vector<2x3x256xf32>
    %cst_6 = arith.constant dense<0.000000e+00> : vector<2x3xf32>
    %7 = vector.multi_reduction <add>, %6, %cst_6 [2] : vector<2x3x256xf32> to vector<2x3xf32>
    %8 = vector.shape_cast %7 : vector<2x3xf32> to vector<2x1x3xf32>
    %cst_7 = arith.constant 9.99999971E-10 : f32
    %9 = vector.broadcast %cst_7 : f32 to vector<2x3x1xf32>
    %10 = arith.addf %5, %9 : vector<2x3x1xf32>
    %11 = vector.broadcast %10 : vector<2x3x1xf32> to vector<2x3x3xf32>
    %12 = arith.divf %2, %11 : vector<2x3x3xf32>
    %13 = arith.mulf %12, %12 : vector<2x3x3xf32>
    %14 = vector.broadcast %5 : vector<2x3x1xf32> to vector<2x3x3xf32>
    %15 = arith.mulf %13, %14 : vector<2x3x3xf32>
    %cst_8 = arith.constant 2.000000e+00 : f32
    %16 = vector.broadcast %cst_8 : f32 to vector<2x3x3xf32>
    %17 = arith.mulf %16, %12 : vector<2x3x3xf32>
    %18 = arith.mulf %17, %2 : vector<2x3x3xf32>
    %19 = vector.broadcast %8 : vector<2x1x3xf32> to vector<2x3x3xf32>
    %20 = arith.subf %19, %18 : vector<2x3x3xf32>
    %21 = arith.addf %20, %15 : vector<2x3x3xf32>
    %cst_9 = arith.constant 9.99999971E-10 : f32
    %22 = vector.broadcast %cst_9 : f32 to vector<2x3x3xf32>
    %23 = arith.addf %21, %22 : vector<2x3x3xf32>
    %24 = math.log %15 : vector<2x3x3xf32>
    %25 = math.log %23 : vector<2x3x3xf32>
    %26 = arith.subf %24, %25 : vector<2x3x3xf32>
    %cst_10 = arith.constant 4.34294462 : f32
    %27 = vector.broadcast %cst_10 : f32 to vector<2x3x3xf32>
    %28 = arith.mulf %27, %26 : vector<2x3x3xf32>
    %c0_11 = arith.constant 0 : index
    %c0_12 = arith.constant 0 : index
    %c0_13 = arith.constant 0 : index
    %29 = vector.load %arg3[%c0_11, %c0_12, %c0_13] : memref<2x3x3xf32, #tpu.memory_space<vmem>>, vector<2x3x3xf32>
    tpu.vector_store %arg3[%c0_11, %c0_12, %c0_13], %28 {strides = array<i32>} : memref<2x3x3xf32, #tpu.memory_space<vmem>>, vector<2x3x3xf32>,
    return
  }
  func.func @transform_0(%arg0: i32) -> (i32, i32, i32) {
    %c0_i32 = arith.constant 0 : i32
    %c0_i32_0 = arith.constant 0 : i32
    %c0_i32_1 = arith.constant 0 : i32
    return %arg0, %c0_i32, %c0_i32_0 : i32, i32, i32
  }
  func.func @transform_1(%arg0: i32) -> (i32, i32, i32) {
    %c0_i32 = arith.constant 0 : i32
    %c0_i32_0 = arith.constant 0 : i32
    %c0_i32_1 = arith.constant 0 : i32
    return %arg0, %c0_i32, %c0_i32_0 : i32, i32, i32
  }
  func.func @transform_2(%arg0: i32) -> (i32, i32, i32) {
    %c0_i32 = arith.constant 0 : i32
    %c0_i32_0 = arith.constant 0 : i32
    %c0_i32_1 = arith.constant 0 : i32
    return %arg0, %c0_i32, %c0_i32_0 : i32, i32, i32
  }
}

</mosaic_0001>

<llo_original>
// kernel: tpu_custom_call.1
$region0: #{tpu_custom_call.1}
  #allocation0 [shape = 'u32[]', space=smem, size = 0x4, offset = 0x4, fixed_abs, tag = 'smem constant byte address 0x4 - core index']
  #allocation1 [shape = 'u32[144,128]{1,0:T(1,128)}', space=vmem, size = 0x12000, scoped, tag = 'internal scratch']
  %s0 = inlined_call_operand.vmem [shape: f32[2,3,256], index: 0, kind: input, shape index: {}]
  %s1 = inlined_call_operand.vmem [shape: f32[2,3,256], index: 1, kind: input, shape index: {}]
  %s2 = inlined_call_operand.vmem [shape: f32[2,3,3], index: 2, kind: output, shape index: {}]
  %s3 = sld [smem:[#allocation0]]
  $region18: #{tpu_custom_call.1} parent=0
    _
  %s5 = ssub.s32 1, %s3
  %s6 = scalar_select 0, %s5, %s3
  // Predicated region
  $region2: #{tpu_custom_call.1} parent=0 // pred_check
    _
  $region3: #{tpu_custom_call.1} parent=0 // pred_check_branch
    %8 = sbr.rel (0) target = $region5
  $region4: #{tpu_custom_call.1} parent=0 // pred_region
    _
  $region5: #{tpu_custom_call.1} parent=0 // pred_fallthru
    _
  // Predicated region
  $region6: #{tpu_custom_call.1} parent=0 // pred_check
    _
  $region7: #{tpu_custom_call.1} parent=0 // pred_check_branch
    %10 = sbr.rel (0) target = $region9
  $region8: #{tpu_custom_call.1} parent=0 // pred_region
    _
  $region9: #{tpu_custom_call.1} parent=0 // pred_fallthru
    _
  %v11 = vld [vmem:[%s0] sm:$0x77]
  %v12 = vld [vmem:[%s0 + $0x8] sm:$0x77]
  %v13 = vld [vmem:[%s1] sm:$0x77]
  %v14 = vld [vmem:[%s1 + $0x8] sm:$0x77]
  %v16 = vcombine.high %v13, %v13
  %v19 = vcombine.high %v11, %v11
  %21 = vmatprep.subr.mxu0 %v19
  %22 = vmatpush1.xpose.msra.mxu0 %v11
  %23 = vmatprep.subr.mxu0 0.0
  %24 = vmatpush1.xpose.msra.mxu0 0.0
  %25 = vmatprep.subr.mxu0 0.0
  %26 = vmatpush1.xpose.msra.mxu0 0.0
  %27 = vmatprep.subr.mxu0 0.0
  %28 = vmatpush1.xpose.msra.mxu0 0.0
  %29 = vmatprep.subr.mxu0 0.0
  %30 = vmatpush1.xpose.msra.mxu0 0.0
  %31 = vmatprep.subr.mxu0 0.0
  %32 = vmatpush1.xpose.msra.mxu0 0.0
  %33 = vmatprep.subr.mxu0 0.0
  %34 = vmatpush1.xpose.msra.mxu0 0.0
  %35 = vmatprep.subr.mxu0 0.0
  %36 = vmatpush1.xpose.msra.mxu0 0.0
  %37 = vmatprep.subr.mxu0 0.0
  %38 = vmatpush1.xpose.msra.mxu0 0.0
  %39 = vmatprep.subr.mxu0 0.0
  %40 = vmatpush1.xpose.msra.mxu0 0.0
  %41 = vmatprep.subr.mxu0 0.0
  %42 = vmatpush1.xpose.msra.mxu0 0.0
  %43 = vmatprep.subr.mxu0 0.0
  %44 = vmatpush1.xpose.msra.mxu0 0.0
  %45 = vmatprep.subr.mxu0 0.0
  %46 = vmatpush1.xpose.msra.mxu0 0.0
  %47 = vmatprep.subr.mxu0 0.0
  %48 = vmatpush1.xpose.msra.mxu0 0.0
  %49 = vmatprep.subr.mxu0 0.0
  %50 = vmatpush1.xpose.msra.mxu0 0.0
  %51 = vmatprep.subr.mxu0 0.0
  %52 = vmatpush1.xpose.msra.mxu0 0.0
  %53 = vmatprep.subr.mxu0 0.0
  %54 = vmatpush1.xpose.msra.mxu0 0.0
  %55 = vmatprep.subr.mxu0 0.0
  %56 = vmatpush1.xpose.msra.mxu0 0.0
  %57 = vmatprep.subr.mxu0 0.0
  %58 = vmatpush1.xpose.msra.mxu0 0.0
  %59 = vmatprep.subr.mxu0 0.0
  %60 = vmatpush1.xpose.msra.mxu0 0.0
  %61 = vmatprep.subr.mxu0 0.0
  %62 = vmatpush1.xpose.msra.mxu0 0.0
  %63 = vmatprep.subr.mxu0 0.0
  %64 = vmatpush1.xpose.msra.mxu0 0.0
  %65 = vmatprep.subr.mxu0 0.0
  %66 = vmatpush1.xpose.msra.mxu0 0.0
  %67 = vmatprep.subr.mxu0 0.0
  %68 = vmatpush1.xpose.msra.mxu0 0.0
  %69 = vmatprep.subr.mxu0 0.0
  %70 = vmatpush1.xpose.msra.mxu0 0.0
  %71 = vmatprep.subr.mxu0 0.0
  %72 = vmatpush1.xpose.msra.mxu0 0.0
  %73 = vmatprep.subr.mxu0 0.0
  %74 = vmatpush1.xpose.msra.mxu0 0.0
  %75 = vmatprep.subr.mxu0 0.0
  %76 = vmatpush1.xpose.msra.mxu0 0.0
  %77 = vmatprep.subr.mxu0 0.0
  %78 = vmatpush1.xpose.msra.mxu0 0.0
  %79 = vmatprep.subr.mxu0 0.0
  %80 = vmatpush1.xpose.msra.mxu0 0.0
  %81 = vmatprep.subr.mxu0 0.0
  %82 = vmatpush1.xpose.msra.mxu0 0.0
  %83 = vmatprep.subr.mxu0 0.0
  %84 = vmatpush1.xpose.msra.mxu0 0.0
  %85 = vmatprep.mubr.f32.mxu0 %v16
  %86 = vmatmul.mubr.f32.gmra.mrb[0].mxu0 %v13
  %v87 = vpop.f32.mrb[0].mxu0
  %v88 = vadd.f32 0.0, %v87
  %v89 = vpop.f32.mrb[0].mxu0
  %90 = vdwg.mxu0
  %v92 = vcombine.high %v14, %v14
  %v95 = vcombine.high %v12, %v12
  %97 = vmatprep.subr.mxu0 %v95
  %98 = vmatpush1.xpose.msra.mxu0 %v12
  %99 = vmatprep.subr.mxu0 0.0
  %100 = vmatpush1.xpose.msra.mxu0 0.0
  %101 = vmatprep.subr.mxu0 0.0
  %102 = vmatpush1.xpose.msra.mxu0 0.0
  %103 = vmatprep.subr.mxu0 0.0
  %104 = vmatpush1.xpose.msra.mxu0 0.0
  %105 = vmatprep.subr.mxu0 0.0
  %106 = vmatpush1.xpose.msra.mxu0 0.0
  %107 = vmatprep.subr.mxu0 0.0
  %108 = vmatpush1.xpose.msra.mxu0 0.0
  %109 = vmatprep.subr.mxu0 0.0
  %110 = vmatpush1.xpose.msra.mxu0 0.0
  %111 = vmatprep.subr.mxu0 0.0
  %112 = vmatpush1.xpose.msra.mxu0 0.0
  %113 = vmatprep.subr.mxu0 0.0
  %114 = vmatpush1.xpose.msra.mxu0 0.0
  %115 = vmatprep.subr.mxu0 0.0
  %116 = vmatpush1.xpose.msra.mxu0 0.0
  %117 = vmatprep.subr.mxu0 0.0
  %118 = vmatpush1.xpose.msra.mxu0 0.0
  %119 = vmatprep.subr.mxu0 0.0
  %120 = vmatpush1.xpose.msra.mxu0 0.0
  %121 = vmatprep.subr.mxu0 0.0
  %122 = vmatpush1.xpose.msra.mxu0 0.0
  %123 = vmatprep.subr.mxu0 0.0
  %124 = vmatpush1.xpose.msra.mxu0 0.0
  %125 = vmatprep.subr.mxu0 0.0
  %126 = vmatpush1.xpose.msra.mxu0 0.0
  %127 = vmatprep.subr.mxu0 0.0
  %128 = vmatpush1.xpose.msra.mxu0 0.0
  %129 = vmatprep.subr.mxu0 0.0
  %130 = vmatpush1.xpose.msra.mxu0 0.0
  %131 = vmatprep.subr.mxu0 0.0
  %132 = vmatpush1.xpose.msra.mxu0 0.0
  %133 = vmatprep.subr.mxu0 0.0
  %134 = vmatpush1.xpose.msra.mxu0 0.0
  %135 = vmatprep.subr.mxu0 0.0
  %136 = vmatpush1.xpose.msra.mxu0 0.0
  %137 = vmatprep.subr.mxu0 0.0
  %138 = vmatpush1.xpose.msra.mxu0 0.0
  %139 = vmatprep.subr.mxu0 0.0
  %140 = vmatpush1.xpose.msra.mxu0 0.0
  %141 = vmatprep.subr.mxu0 0.0
  %142 = vmatpush1.xpose.msra.mxu0 0.0
  %143 = vmatprep.subr.mxu0 0.0
  %144 = vmatpush1.xpose.msra.mxu0 0.0
  %145 = vmatprep.subr.mxu0 0.0
  %146 = vmatpush1.xpose.msra.mxu0 0.0
  %147 = vmatprep.subr.mxu0 0.0
  %148 = vmatpush1.xpose.msra.mxu0 0.0
  %149 = vmatprep.subr.mxu0 0.0
  %150 = vmatpush1.xpose.msra.mxu0 0.0
  %151 = vmatprep.subr.mxu0 0.0
  %152 = vmatpush1.xpose.msra.mxu0 0.0
  %153 = vmatprep.subr.mxu0 0.0
  %154 = vmatpush1.xpose.msra.mxu0 0.0
  %155 = vmatprep.subr.mxu0 0.0
  %156 = vmatpush1.xpose.msra.mxu0 0.0
  %157 = vmatprep.subr.mxu0 0.0
  %158 = vmatpush1.xpose.msra.mxu0 0.0
  %159 = vmatprep.subr.mxu0 0.0
  %160 = vmatpush1.xpose.msra.mxu0 0.0
  %161 = vmatprep.mubr.f32.mxu0 %v92
  %162 = vmatmul.mubr.f32.gmra.mrb[0].mxu0 %v14
  %v163 = vpop.f32.mrb[0].mxu0
  %v164 = vadd.f32 0.0, %v163
  %v165 = vpop.f32.mrb[0].mxu0
  %166 = vdwg.mxu0
  %v167 = vmul.f32 %v13, %v13
  %v168 = vmul.f32 %v14, %v14
  %v171 = vcombine.high %v167, %v167
  %v172 = vcombine.high %v168, %v168
  %vm175 = vcmask 1042432
  %v176 = vsel %vm175, %v167, 0.0
  %v177 = vsel %vm175, %v171, 0.0
  %v178 = vadd.f32 %v176, %v177
  %179 = vadd.xlane.f32.xlu0 %v178
  %v180 = vpop.xlane.xlu0 %179
  %v181 = vsel %vm175, %v168, 0.0
  %v182 = vsel %vm175, %v172, 0.0
  %v183 = vadd.f32 %v181, %v182
  %184 = vadd.xlane.f32.xlu0 %v183
  %v185 = vpop.xlane.xlu0 %184
  %v186 = vmul.f32 %v11, %v11
  %v187 = vmul.f32 %v12, %v12
  %v190 = vcombine.high %v186, %v186
  %v191 = vcombine.high %v187, %v187
  %v194 = vsel %vm175, %v186, 0.0
  %v195 = vsel %vm175, %v190, 0.0
  %v196 = vadd.f32 %v194, %v195
  %197 = vadd.xlane.f32.xlu0 %v196
  %v198 = vpop.xlane.xlu0 %197
  %v199 = vsel %vm175, %v187, 0.0
  %v200 = vsel %vm175, %v191, 0.0
  %v201 = vadd.f32 %v199, %v200
  %202 = vadd.xlane.f32.xlu0 %v201
  %v203 = vpop.xlane.xlu0 %202
  %v204 = vadd.f32 %v180, 1e-09
  %v205 = vadd.f32 %v185, 1e-09
  %v206 = vrcp.pop %v204
  %v207 = vmul.f32 %v88, %v206
  %v208 = vrcp.pop %v205
  %v209 = vmul.f32 %v164, %v208
  %v210 = vmul.f32 %v207, %v207
  %v211 = vmul.f32 %v209, %v209
  %v212 = vmul.f32 %v210, %v180
  %v213 = vmul.f32 %v211, %v185
  %v214 = vmul.f32 %v207, 2.0
  %v215 = vmul.f32 %v209, 2.0
  %v216 = vmul.f32 %v214, %v88
  %v217 = vmul.f32 %v215, %v164
  %v220 = vlaneseq
  %v221 = vshrl.u32 %v220, 7
  %v222 = vsub.s32 0, %v221
  %v223 = vrot.slane %v216, %v222
  %225 = vbcast.lane.b32.xlu0 %v223, 256
  %v226 = vpop.permute.xlu0 %225
  %v227 = vlaneseq
  %v228 = vshrl.u32 %v227, 7
  %v229 = vsub.s32 1, %v228
  %v230 = vrot.slane %v216, %v229
  %232 = vbcast.lane.b32.xlu0 %v230, 256
  %v233 = vpop.permute.xlu0 %232
  %v234 = vlaneseq
  %v235 = vshrl.u32 %v234, 7
  %v236 = vsub.s32 2, %v235
  %v237 = vrot.slane %v216, %v236
  %239 = vbcast.lane.b32.xlu0 %v237, 256
  %v240 = vpop.permute.xlu0 %239
  %v241 = vlaneseq
  %v242 = vshrl.u32 %v241, 7
  %v243 = vsub.s32 0, %v242
  %v244 = vrot.slane %v217, %v243
  %246 = vbcast.lane.b32.xlu0 %v244, 256
  %v247 = vpop.permute.xlu0 %246
  %v248 = vlaneseq
  %v249 = vshrl.u32 %v248, 7
  %v250 = vsub.s32 1, %v249
  %v251 = vrot.slane %v217, %v250
  %253 = vbcast.lane.b32.xlu0 %v251, 256
  %v254 = vpop.permute.xlu0 %253
  %v255 = vlaneseq
  %v256 = vshrl.u32 %v255, 7
  %v257 = vsub.s32 2, %v256
  %v258 = vrot.slane %v217, %v257
  %260 = vbcast.lane.b32.xlu0 %v258, 256
  %v261 = vpop.permute.xlu0 %260
  %v268 = vsub.f32 %v198, %v226
  %v269 = vsub.f32 %v198, %v233
  %v270 = vsub.f32 %v198, %v240
  %v271 = vsub.f32 %v203, %v247
  %v272 = vsub.f32 %v203, %v254
  %v273 = vsub.f32 %v203, %v261
  %v276 = vlaneseq
  %v277 = vshrl.u32 %v276, 7
  %v278 = vsub.s32 0, %v277
  %v279 = vrot.slane %v212, %v278
  %281 = vbcast.lane.b32.xlu0 %v279, 256
  %v282 = vpop.permute.xlu0 %281
  %v283 = vlaneseq
  %v284 = vshrl.u32 %v283, 7
  %v285 = vsub.s32 1, %v284
  %v286 = vrot.slane %v212, %v285
  %288 = vbcast.lane.b32.xlu0 %v286, 256
  %v289 = vpop.permute.xlu0 %288
  %v290 = vlaneseq
  %v291 = vshrl.u32 %v290, 7
  %v292 = vsub.s32 2, %v291
  %v293 = vrot.slane %v212, %v292
  %295 = vbcast.lane.b32.xlu0 %v293, 256
  %v296 = vpop.permute.xlu0 %295
  %v297 = vlaneseq
  %v298 = vshrl.u32 %v297, 7
  %v299 = vsub.s32 0, %v298
  %v300 = vrot.slane %v213, %v299
  %302 = vbcast.lane.b32.xlu0 %v300, 256
  %v303 = vpop.permute.xlu0 %302
  %v304 = vlaneseq
  %v305 = vshrl.u32 %v304, 7
  %v306 = vsub.s32 1, %v305
  %v307 = vrot.slane %v213, %v306
  %309 = vbcast.lane.b32.xlu0 %v307, 256
  %v310 = vpop.permute.xlu0 %309
  %v311 = vlaneseq
  %v312 = vshrl.u32 %v311, 7
  %v313 = vsub.s32 2, %v312
  %v314 = vrot.slane %v213, %v313
  %316 = vbcast.lane.b32.xlu0 %v314, 256
  %v317 = vpop.permute.xlu0 %316
  %v324 = vadd.f32 %v268, %v282
  %v325 = vadd.f32 %v269, %v289
  %v326 = vadd.f32 %v270, %v296
  %v327 = vadd.f32 %v271, %v303
  %v328 = vadd.f32 %v272, %v310
  %v329 = vadd.f32 %v273, %v317
  %v330 = vadd.f32 %v324, 1e-09
  %v331 = vadd.f32 %v325, 1e-09
  %v332 = vadd.f32 %v326, 1e-09
  %v333 = vadd.f32 %v327, 1e-09
  %v334 = vadd.f32 %v328, 1e-09
  %v335 = vadd.f32 %v329, 1e-09
  %v336 = vlog2.pop %v212
  %v337 = vmul.f32 %v336, 0.6931472
  %v338 = vlog2.pop %v213
  %v339 = vmul.f32 %v338, 0.6931472
  %v340 = vlog2.pop %v330
  %v341 = vmul.f32 %v340, 0.6931472
  %v342 = vlog2.pop %v331
  %v343 = vmul.f32 %v342, 0.6931472
  %v344 = vlog2.pop %v332
  %v345 = vmul.f32 %v344, 0.6931472
  %v346 = vlog2.pop %v333
  %v347 = vmul.f32 %v346, 0.6931472
  %v348 = vlog2.pop %v334
  %v349 = vmul.f32 %v348, 0.6931472
  %v350 = vlog2.pop %v335
  %v351 = vmul.f32 %v350, 0.6931472
  %358 = vset.pattern.permute.xlu0 0
  %359 = vperm.xlu0 %358, %v341
  %v360 = vpop.permute.xlu0 %359
  %361 = vset.pattern.permute.xlu0 0
  %362 = vperm.xlu0 %361, %v343
  %v363 = vpop.permute.xlu0 %362
  %364 = vset.pattern.permute.xlu0 0
  %365 = vperm.xlu0 %364, %v345
  %v366 = vpop.permute.xlu0 %365
  %367 = vset.pattern.permute.xlu0 0
  %368 = vperm.xlu0 %367, %v347
  %v369 = vpop.permute.xlu0 %368
  %370 = vset.pattern.permute.xlu0 0
  %371 = vperm.xlu0 %370, %v349
  %v372 = vpop.permute.xlu0 %371
  %373 = vset.pattern.permute.xlu0 0
  %374 = vperm.xlu0 %373, %v351
  %v375 = vpop.permute.xlu0 %374
  %v376 = vlaneseq
  %v377 = vand.u32 %v376, 127
  %v378 = vlaneseq
  %v379 = vshrl.u32 %v378, 7
  %v380 = vsub.s32 %v377, %v379
  %v381 = vrot.slane %v360, %v380
  %v382 = vlaneseq
  %v383 = vshrl.u32 %v382, 7
  %v384 = vsub.s32 %v377, %v383
  %v385 = vrot.slane %v363, %v384
  %v386 = vlaneseq
  %v387 = vshrl.u32 %v386, 7
  %v388 = vsub.s32 %v377, %v387
  %v389 = vrot.slane %v366, %v388
  %v390 = vlaneseq
  %v391 = vshrl.u32 %v390, 7
  %v392 = vsub.s32 %v377, %v391
  %v393 = vrot.slane %v369, %v392
  %v394 = vlaneseq
  %v395 = vshrl.u32 %v394, 7
  %v396 = vsub.s32 %v377, %v395
  %v397 = vrot.slane %v372, %v396
  %v398 = vlaneseq
  %v399 = vshrl.u32 %v398, 7
  %v400 = vsub.s32 %v377, %v399
  %v401 = vrot.slane %v375, %v400
  %vm402 = vcmask 1041409
  %v403 = vsel %vm402, %v385, %v381
  %vm404 = vcmask 1042434
  %v405 = vsel %vm404, %v389, %v403
  %v406 = vsel %vm402, %v397, %v393
  %v407 = vsel %vm404, %v401, %v406
  %v410 = vsub.f32 %v337, %v405
  %v411 = vsub.f32 %v339, %v407
  %v412 = vmul.f32 %v410, 4.3429446
  %v413 = vmul.f32 %v411, 4.3429446
  %vm414 = vcmask 18432
  %415 = vst.msk [vmem:[%s2] sm:$0x7] %vm414, %v412
  %416 = vst.msk [vmem:[%s2 + $0x4] sm:$0x7] %vm414, %v413
  // Predicated region
  $region10: #{tpu_custom_call.1} parent=0 // pred_check
    _
  $region11: #{tpu_custom_call.1} parent=0 // pred_check_branch
    %418 = sbr.rel (0) target = $region13
  $region12: #{tpu_custom_call.1} parent=0 // pred_region
    _
  $region13: #{tpu_custom_call.1} parent=0 // pred_fallthru
    _
  // Predicated region
  $region14: #{tpu_custom_call.1} parent=0 // pred_check
    _
  $region15: #{tpu_custom_call.1} parent=0 // pred_check_branch
    %420 = sbr.rel (0) target = $region17
  $region16: #{tpu_custom_call.1} parent=0 // pred_region
    _
  $region17: #{tpu_custom_call.1} parent=0 // pred_fallthru
    _

</llo_original>
